<compile_context>
chip_gen: v7x
topology: tpu7x:2x2x1
jax: 0.10.0
libtpu: 0.0.40
codegen_flags: <defaults>
</compile_context>

<pallas_src>
import functools

import jax
import jax.numpy as jnp
from jax.experimental import pallas as pl
from jax.experimental.pallas import tpu as pltpu


# A handful of outstanding DMAs keeps the copy engines busy; more adds nothing.
_MAX_DMA_CHUNKS = 8


def _dma_copy_kernel(x_hbm, o_hbm, sems, *, row_starts, row_sizes):
    """Copy x_hbm -> o_hbm with a few chunked HBM->HBM DMAs (no VMEM staging).

    x_hbm / o_hbm are the full (N, F) refs left in place (memory_space=pl.ANY).
    Row chunks of a row-major (N, F) array are contiguous, so each DMA is one
    large linear transfer.  Issue all starts first, then wait, so the copies
    overlap across DMA queues.
    """
    copies = []
    for c, (r0, rn) in enumerate(zip(row_starts, row_sizes)):
        cp = pltpu.make_async_copy(
            x_hbm.at[pl.ds(r0, rn), :],
            o_hbm.at[pl.ds(r0, rn), :],
            sems.at[c],
        )
        cp.start()
        copies.append(cp)
    for cp in copies:
        cp.wait()


def flatten_layer(x):
    """Pallas equivalent of FlattenLayer.forward: x.view(x.shape[0], -1)."""
    N = x.shape[0]
    F = 1
    for d in x.shape[1:]:
        F *= d

    # Metadata-only row-major collapse — identical element order to torch's
    # .view on a contiguous tensor.  The Pallas kernel below only moves the
    # already-flat bytes HBM -> HBM.
    x_flat = x.reshape(N, F)

    if N == 0 or F == 0:
        return jnp.zeros((N, F), dtype=x.dtype)

    # Static row chunking (sizes are Python ints, baked into the kernel).
    num_chunks = max(1, min(_MAX_DMA_CHUNKS, N))
    base = N // num_chunks
    rem = N % num_chunks
    row_sizes = tuple(base + (1 if c < rem else 0) for c in range(num_chunks))
    row_starts = tuple(sum(row_sizes[:c]) for c in range(num_chunks))

    itemsize = jnp.dtype(x.dtype).itemsize

    kernel = functools.partial(
        _dma_copy_kernel, row_starts=row_starts, row_sizes=row_sizes)

    out = pl.pallas_call(
        kernel,
        out_shape=jax.ShapeDtypeStruct((N, F), x.dtype),
        in_specs=[pl.BlockSpec(memory_space=pl.ANY)],
        out_specs=pl.BlockSpec(memory_space=pl.ANY),
        scratch_shapes=[pltpu.SemaphoreType.DMA((num_chunks,))],
        cost_estimate=pl.CostEstimate(
            flops=0,
            transcendentals=0,
            bytes_accessed=2 * N * F * itemsize),
    )(x_flat)
    return out


if __name__ == "__main__":
    # FlattenLayer has no parameters; just build a deterministic input.
    key = jax.random.PRNGKey(0)
    x = jax.random.normal(key, (2, 4, 16, 16), dtype=jnp.float32)

    y = flatten_layer(x)
    y = jax.block_until_ready(y)

    # Reference: exactly what torch's x.view(x.shape[0], -1) computes.
    y_ref = x.reshape(x.shape[0], -1)

    assert y.shape == (2, 4 * 16 * 16), y.shape
    assert y.dtype == x.dtype
    assert jnp.array_equal(y, y_ref), "flatten mismatch vs reference"

    print("KERNEL_OK")
</pallas_src>

<mosaic_0001>
module attributes {stable_mosaic.version = 11 : i64} {
  func.func @_dma_copy_kernel(%arg0: memref<2x1024xf32, #tpu.memory_space<any>>, %arg1: memref<2x1024xf32, #tpu.memory_space<any>>, %arg2: memref<2x!tpu.dma_semaphore, #tpu.memory_space<semaphore_mem>>) attributes {dimension_semantics = [], scalar_prefetch = 0 : i64, scratch_operands = 1 : i64, tpu.core_type = #tpu.core_type<tc>} {
    %c0_i32 = arith.constant 0 : i32
    %c0_i32_0 = arith.constant 0 : i32
    %c0_i32_1 = arith.constant 0 : i32
    %0 = tpu.memref_slice %arg0[%c0_i32_0, %c0_i32_1] : memref<2x1024xf32, #tpu.memory_space<any>> -> memref<1x1024xf32, #tpu.memory_space<any>>
    %c0_i32_2 = arith.constant 0 : i32
    %c0_i32_3 = arith.constant 0 : i32
    %1 = tpu.memref_slice %arg1[%c0_i32_2, %c0_i32_3] : memref<2x1024xf32, #tpu.memory_space<any>> -> memref<1x1024xf32, #tpu.memory_space<any>>
    %2 = tpu.memref_slice %arg2[%c0_i32] : memref<2x!tpu.dma_semaphore, #tpu.memory_space<semaphore_mem>> -> memref<1x!tpu.dma_semaphore, #tpu.memory_space<semaphore_mem>>
    %3 = tpu.memref_squeeze %2 : memref<1x!tpu.dma_semaphore, #tpu.memory_space<semaphore_mem>> -> memref<!tpu.dma_semaphore, #tpu.memory_space<semaphore_mem>>
    tpu.enqueue_dma source(%0 : memref<1x1024xf32, #tpu.memory_space<any>>) target(%1 : memref<1x1024xf32, #tpu.memory_space<any>>) target_semaphore(%3 : memref<!tpu.dma_semaphore, #tpu.memory_space<semaphore_mem>>)
    %c1_i32 = arith.constant 1 : i32
    %c1_i32_4 = arith.constant 1 : i32
    %c0_i32_5 = arith.constant 0 : i32
    %4 = tpu.memref_slice %arg0[%c1_i32_4, %c0_i32_5] : memref<2x1024xf32, #tpu.memory_space<any>> -> memref<1x1024xf32, #tpu.memory_space<any>>
    %c1_i32_6 = arith.constant 1 : i32
    %c0_i32_7 = arith.constant 0 : i32
    %5 = tpu.memref_slice %arg1[%c1_i32_6, %c0_i32_7] : memref<2x1024xf32, #tpu.memory_space<any>> -> memref<1x1024xf32, #tpu.memory_space<any>>
    %6 = tpu.memref_slice %arg2[%c1_i32] : memref<2x!tpu.dma_semaphore, #tpu.memory_space<semaphore_mem>> -> memref<1x!tpu.dma_semaphore, #tpu.memory_space<semaphore_mem>>
    %7 = tpu.memref_squeeze %6 : memref<1x!tpu.dma_semaphore, #tpu.memory_space<semaphore_mem>> -> memref<!tpu.dma_semaphore, #tpu.memory_space<semaphore_mem>>
    tpu.enqueue_dma source(%4 : memref<1x1024xf32, #tpu.memory_space<any>>) target(%5 : memref<1x1024xf32, #tpu.memory_space<any>>) target_semaphore(%7 : memref<!tpu.dma_semaphore, #tpu.memory_space<semaphore_mem>>)
    %c0_i32_8 = arith.constant 0 : i32
    %c0_i32_9 = arith.constant 0 : i32
    %c0_i32_10 = arith.constant 0 : i32
    %8 = tpu.memref_slice %arg0[%c0_i32_9, %c0_i32_10] : memref<2x1024xf32, #tpu.memory_space<any>> -> memref<1x1024xf32, #tpu.memory_space<any>>
    %c0_i32_11 = arith.constant 0 : i32
    %c0_i32_12 = arith.constant 0 : i32
    %9 = tpu.memref_slice %arg1[%c0_i32_11, %c0_i32_12] : memref<2x1024xf32, #tpu.memory_space<any>> -> memref<1x1024xf32, #tpu.memory_space<any>>
    %10 = tpu.memref_slice %arg2[%c0_i32_8] : memref<2x!tpu.dma_semaphore, #tpu.memory_space<semaphore_mem>> -> memref<1x!tpu.dma_semaphore, #tpu.memory_space<semaphore_mem>>
    %11 = tpu.memref_squeeze %10 : memref<1x!tpu.dma_semaphore, #tpu.memory_space<semaphore_mem>> -> memref<!tpu.dma_semaphore, #tpu.memory_space<semaphore_mem>>
    tpu.wait_dma2 semaphore(%11 : memref<!tpu.dma_semaphore, #tpu.memory_space<semaphore_mem>>) src(%8 : memref<1x1024xf32, #tpu.memory_space<any>>) dst(%9 : memref<1x1024xf32, #tpu.memory_space<any>>)
    %c1_i32_13 = arith.constant 1 : i32
    %c1_i32_14 = arith.constant 1 : i32
    %c0_i32_15 = arith.constant 0 : i32
    %12 = tpu.memref_slice %arg0[%c1_i32_14, %c0_i32_15] : memref<2x1024xf32, #tpu.memory_space<any>> -> memref<1x1024xf32, #tpu.memory_space<any>>
    %c1_i32_16 = arith.constant 1 : i32
    %c0_i32_17 = arith.constant 0 : i32
    %13 = tpu.memref_slice %arg1[%c1_i32_16, %c0_i32_17] : memref<2x1024xf32, #tpu.memory_space<any>> -> memref<1x1024xf32, #tpu.memory_space<any>>
    %14 = tpu.memref_slice %arg2[%c1_i32_13] : memref<2x!tpu.dma_semaphore, #tpu.memory_space<semaphore_mem>> -> memref<1x!tpu.dma_semaphore, #tpu.memory_space<semaphore_mem>>
    %15 = tpu.memref_squeeze %14 : memref<1x!tpu.dma_semaphore, #tpu.memory_space<semaphore_mem>> -> memref<!tpu.dma_semaphore, #tpu.memory_space<semaphore_mem>>
    tpu.wait_dma2 semaphore(%15 : memref<!tpu.dma_semaphore, #tpu.memory_space<semaphore_mem>>) src(%12 : memref<1x1024xf32, #tpu.memory_space<any>>) dst(%13 : memref<1x1024xf32, #tpu.memory_space<any>>)
    return
  }
}

</mosaic_0001>

<llo_original>
// kernel: tpu_custom_call.1
$region0: #{tpu_custom_call.1}
  #allocation0 [shape = 'u32[]', space=smem, size = 0x4, offset = 0x4, fixed_abs, tag = 'smem constant byte address 0x4 - core index']
  #allocation1 [shape = 'u32[144,128]{1,0:T(1,128)}', space=vmem, size = 0x12000, scoped, tag = 'internal scratch']
  #allocation2 [shape = 's32[2]{0}', space=sflag, size = 0x8, scoped, tag = 'scratch operand']
  #allocation3 [shape = 's32[]', space=sflag, size = 0x4, offset = 0, fixed_abs, tag = 'sflag constant byte address 0x0 - dummy sync flag']
  #allocation5 [shape = 's32[]', space=sflag, size = 0x4, offset = 0, fixed_abs, tag = 'sflag constant byte address 0x0 - dummy sync flag']
  %s0 = inlined_call_operand.hbm [shape: f32[2,1024], index: 0, kind: input, shape index: {}]
  %s1 = inlined_call_operand.hbm [shape: f32[2,1024], index: 1, kind: output, shape index: {}]
  %s2 = sld [smem:[#allocation0]]
  $region2: #{tpu_custom_call.1} parent=0
    _
  %s4 = ssub.s32 1, %s2
  %s5 = scalar_select 0, %s4, %s2
  $region1: #{tpu_custom_call.1} parent=0
    #allocation4 [shape = 'u32[3]{0}', space=smem, size = 0xc, scoped, tag = 'DMA stride descriptor']
    #allocation6 [shape = 'u32[3]{0}', space=smem, size = 0xc, scoped, tag = 'DMA stride descriptor']
    %s7 = sshll.u32 1, 14
    %s8 = sxor.u32 4294967295, %s7
    %s11 = sshll.u32 3, 24
    %s12 = sxor.u32 4294967295, %s11
    %s13 = sand.u32 0, %s12
    %s15 = sor.u32 %s13, 0
    %18 = sst [smem:[#allocation4]] 32
    %s19 = scalar_lea.smem [#allocation4], 1
    %20 = sst [smem:[%s19]] 32
    %s21 = scalar_lea.smem [#allocation4], 2
    %22 = sst [smem:[%s21]] 1
    %24 = dma.general %s0, 128, %s1, [#allocation2], [#allocation3], [#allocation4], %s15, 0
    %s25 = scalar_lea.hbm %s0, 16
    %s26 = scalar_lea.hbm %s1, 16
    %s27 = scalar_lea.sflag [#allocation2], 1
    %s29 = sshll.u32 1, 14
    %s30 = sxor.u32 4294967295, %s29
    %s33 = sshll.u32 3, 24
    %s34 = sxor.u32 4294967295, %s33
    %s35 = sand.u32 0, %s34
    %s37 = sor.u32 %s35, 0
    %40 = sst [smem:[#allocation6]] 32
    %s41 = scalar_lea.smem [#allocation6], 1
    %42 = sst [smem:[%s41]] 32
    %s43 = scalar_lea.smem [#allocation6], 2
    %44 = sst [smem:[%s43]] 1
    %46 = dma.general %s25, 128, %s26, %s27, [#allocation5], [#allocation6], %s37, 0
    %s47 = smul.u32 1, 8
    %s48 = sshll.u32 %s47, 4
    %49 = dma.done [#allocation2], %s48
    %s50 = sshll.u32 %s47, 4
    %51 = dma.done %s27, %s50
  %52 = vsyncmov [#allocation2]
  %s53 = vpop.sfrf %52
  %p54 = scmp.eq.s32.totalorder %s53, 0
  %p55 = pneg %p54
  %57 = shalt.err (%p55)
  %s58 = scalar_lea.sflag [#allocation2], 1
  %59 = vsyncmov %s58
  %s60 = vpop.sfrf %59
  %p61 = scmp.eq.s32.totalorder %s60, 0
  %p62 = pneg %p61
  %64 = shalt.err (%p62)

</llo_original>
